<compile_context>
chip_gen: v6e
topology: v6e:2x2x1
jax: 0.10.0
libtpu: 0.0.40
codegen_flags: <defaults>
</compile_context>

<pallas_src>
import functools
from itertools import combinations

import numpy as np
import jax
import jax.numpy as jnp
from jax.experimental import pallas as pl
from jax.experimental.pallas import tpu as pltpu

MARGIN = 0.2
EPS = 1e-12          # matches torch.nn.functional.normalize default eps
LANE = 128

_VMEM_BUDGET = 40 * 1024 * 1024   # planning budget for one grid step
_VMEM_LIMIT = 48 * 1024 * 1024    # scoped VMEM limit requested from Mosaic


def _round_up(x, m):
    return (x + m - 1) // m * m


# ---------------------------------------------------------------------------
# Fused kernel: normalize LHS rows + RHS rows in-kernel (f32), then
#   dist[i, j] = max(2 - 2 * <en_i, en_j>, 0)   (rows are unit norm)
# The same body serves both grid layouts (resident RHS / tiled RHS).
# ---------------------------------------------------------------------------
def _fused_norm_gram_kernel(lhs_ref, rhs_ref, dist_ref, *, compute_dtype):
    lhs = lhs_ref[...].astype(jnp.float32)
    # rsqrt lowers to the (otherwise idle) EUP slot.  max(sq, eps^2) ==
    # max(norm, eps) for norm > eps, and zero rows map to exactly 0, matching
    # F.normalize.
    lhs_n = lhs * jax.lax.rsqrt(
        jnp.maximum(jnp.sum(lhs * lhs, axis=1, keepdims=True), EPS * EPS))

    rhs = rhs_ref[...].astype(jnp.float32)
    rhs_n = rhs * jax.lax.rsqrt(
        jnp.maximum(jnp.sum(rhs * rhs, axis=1, keepdims=True), EPS * EPS))

    # dot_general with contracting dims (1, 1): the contraction is fed to the
    # MXU as trans_b — no explicit .T / XLU transpose.  bf16 inputs (default)
    # with f32 accumulation are native MXU on v5e/v6e/v7x.
    acc = jax.lax.dot_general(
        lhs_n.astype(compute_dtype), rhs_n.astype(compute_dtype),
        dimension_numbers=(((1,), (1,)), ((), ())),
        preferred_element_type=jnp.float32)

    # Clamp: 2 - 2<a,b> can go slightly negative from rounding (esp. bf16).
    dist_ref[...] = jnp.maximum(2.0 - 2.0 * acc, 0.0)


# ---------------------------------------------------------------------------
# VMEM planning helpers (rough per-grid-step estimates, bytes)
# ---------------------------------------------------------------------------
def _vmem_resident(tile_m, b_cols, d_pad, cd_bytes):
    lhs = 2 * tile_m * d_pad * 4            # double-buffered f32 LHS row block
    rhs = 2 * b_cols * d_pad * 4            # constant-index full RHS (budget 2 bufs)
    out = 2 * tile_m * b_cols * 4           # double-buffered output block
    tmp = (tile_m + b_cols) * d_pad * (4 + cd_bytes) + tile_m * b_cols * 4
    return lhs + rhs + out + tmp


def _vmem_tiled(tile, d_pad, cd_bytes):
    io = 2 * 2 * tile * d_pad * 4 + 2 * tile * tile * 4
    tmp = 2 * tile * d_pad * (4 + cd_bytes) + tile * tile * 4
    return io + tmp


# ---------------------------------------------------------------------------
# Pairwise squared distances between L2-normalized rows of x.
# Returns dist_pad (B_rows_pad, B_cols_pad) f32; only [:B, :B] is meaningful.
# ---------------------------------------------------------------------------
def pairwise_sq_dists(x, *, compute_dtype=jnp.bfloat16):
    B, D = x.shape
    cd_bytes = jnp.dtype(compute_dtype).itemsize
    d_pad = _round_up(max(D, LANE), LANE)       # contracting dim lane-dense
    b_cols = _round_up(max(B, 8), LANE)         # dist lane dim: unmasked stores
    b_rows8 = _round_up(max(B, 8), 8)           # rows only need sublane align

    x32 = x.astype(jnp.float32)

    # --- plan: prefer the RHS-resident single-pass layout --------------------
    candidates = []
    if b_rows8 <= 1024:
        candidates.append(b_rows8)              # single row tile, minimal padding
    candidates += [512, 256, 128]

    best = None
    for tm in candidates:
        b_rows = _round_up(b_rows8, tm)
        if _vmem_resident(tm, b_cols, d_pad, cd_bytes) <= _VMEM_BUDGET:
            key = (b_rows, -tm)                 # least padding, then biggest tile
            if best is None or key < best[0]:
                best = (key, tm, b_rows)

    kernel = functools.partial(_fused_norm_gram_kernel,
                               compute_dtype=compute_dtype)
    cparams = pltpu.CompilerParams(vmem_limit_bytes=_VMEM_LIMIT,
                                   dimension_semantics=("parallel",))

    if best is not None:
        _, tile_m, b_rows = best
        b_max = max(b_rows, b_cols)
        x_pad = jnp.pad(x32, ((0, b_max - B), (0, d_pad - D)))
        x_rows = x_pad[:b_rows]
        x_cols = x_pad[:b_cols]
        dist_pad = pl.pallas_call(
            kernel,
            grid=(b_rows // tile_m,),
            out_shape=jax.ShapeDtypeStruct((b_rows, b_cols), jnp.float32),
            in_specs=[
                pl.BlockSpec((tile_m, d_pad), lambda i: (i, 0)),   # LHS row block
                pl.BlockSpec((b_cols, d_pad), lambda i: (0, 0)),   # RHS: resident, fetched once
            ],
            out_specs=pl.BlockSpec((tile_m, b_cols), lambda i: (i, 0)),
            compiler_params=cparams,
        )(x_rows, x_cols)
        return dist_pad

    # --- fallback: 2-D tiled fused kernel (RHS streamed per row block) -------
    # TODO(synk): for very large D, a K-grid axis with an f32 accumulator
    # scratch (raw gram + sq-norm accumulation) would be needed; not done here.
    tile = 128
    for t in (512, 256, 128):
        if _vmem_tiled(t, d_pad, cd_bytes) <= _VMEM_BUDGET:
            tile = t
            break
    b_sq = _round_up(max(B, 8), tile)
    x_pad = jnp.pad(x32, ((0, b_sq - B), (0, d_pad - D)))
    dist_pad = pl.pallas_call(
        kernel,
        grid=(b_sq // tile, b_sq // tile),
        out_shape=jax.ShapeDtypeStruct((b_sq, b_sq), jnp.float32),
        in_specs=[
            pl.BlockSpec((tile, d_pad), lambda i, j: (i, 0)),
            pl.BlockSpec((tile, d_pad), lambda i, j: (j, 0)),
        ],
        out_specs=pl.BlockSpec((tile, tile), lambda i, j: (i, j)),
        compiler_params=pltpu.CompilerParams(
            vmem_limit_bytes=_VMEM_LIMIT,
            dimension_semantics=("parallel", "parallel")),
    )(x_pad, x_pad)
    return dist_pad


# ---------------------------------------------------------------------------
# Loss from dist entries (device-resident; O(T) gather + reduction)
# ---------------------------------------------------------------------------
def triplet_loss_from_dist(dist, triplets, margin, is_distance=True):
    a, p, n = triplets[:, 0], triplets[:, 1], triplets[:, 2]
    d_ap = dist[a, p]          # == ||en_a - en_p||^2  (rows are unit norm)
    d_an = dist[a, n]
    if is_distance:
        losses = jnp.maximum(d_ap - d_an + margin, 0.0)
    else:
        # <x, y> = 1 - dist/2 for unit-norm rows
        s_ap = 1.0 - 0.5 * d_ap
        s_an = 1.0 - 0.5 * d_an
        losses = 2.0 * jnp.maximum(s_an - s_ap + margin, 0.0)
    return jnp.mean(losses)


# ---------------------------------------------------------------------------
# Triplet selection (host glue) — deterministic replica of
# RandomNegativeTripletSelector with a fixed RNG seed.
# ---------------------------------------------------------------------------
def select_triplets(dist, labels, margin, seed=0):
    # TODO(synk): the original selector uses un-seeded np.random for the random
    # hard-negative choice; we fix the seed here for determinism.
    rng = np.random.RandomState(seed)
    dist = np.asarray(dist)
    labels = np.asarray(labels)
    triplets = []
    last_ap = None
    last_neg = None
    for label in sorted(set(labels.tolist())):
        label_mask = labels == label
        label_indices = np.where(label_mask)[0]
        if len(label_indices) < 2:
            continue
        negative_indices = np.where(~label_mask)[0]
        if len(negative_indices) == 0:
            continue
        anchor_positives = np.array(list(combinations(label_indices, 2)))
        ap_distances = dist[anchor_positives[:, 0], anchor_positives[:, 1]]
        last_ap = anchor_positives[0]
        last_neg = negative_indices[0]
        for anchor_positive, ap_distance in zip(anchor_positives, ap_distances):
            loss_values = (ap_distance
                           - dist[anchor_positive[0], negative_indices]
                           + margin)
            hard = np.where(loss_values > 0)[0]
            if len(hard) > 0:
                neg = negative_indices[rng.choice(hard)]
                triplets.append([anchor_positive[0], anchor_positive[1], neg])
    if len(triplets) == 0:
        if last_ap is None:
            raise ValueError(
                "select_triplets: no label has >=2 samples with a negative; "
                "cannot form any triplet.")
        triplets.append([last_ap[0], last_ap[1], last_neg])
    return np.array(triplets, dtype=np.int32)


# ---------------------------------------------------------------------------
# Full forward (mirrors OnlineTripletLoss.forward)
# ---------------------------------------------------------------------------
def online_triplet_loss(embeddings, labels, margin=MARGIN, is_distance=True,
                        compute_dtype=jnp.bfloat16):
    B = embeddings.shape[0]
    dist_pad = pairwise_sq_dists(embeddings, compute_dtype=compute_dtype)
    # Single device->host sync: only the valid (B, B) distance slab is pulled
    # for the data-dependent, dynamically sized triplet selection.
    # TODO(synk): the D2H copy could be shrunk (bf16 cast) or the selection
    # moved on-device (masked compare + categorical pick) if it shows in traces.
    dist_host = np.asarray(dist_pad[:B, :B])
    triplets = select_triplets(dist_host, np.asarray(labels), margin)
    tri = jnp.asarray(triplets)
    # Loss computed on device straight from dist entries — no (T, D) gathers,
    # no second pallas_call.
    return triplet_loss_from_dist(dist_pad, tri, margin, is_distance=is_distance)


if __name__ == "__main__":
    key = jax.random.PRNGKey(0)
    B, D = 16, 32
    num_classes = 4
    k_emb, k_lbl = jax.random.split(key)
    embeddings = jax.random.normal(k_emb, (B, D), dtype=jnp.float32)
    labels = np.array(
        jax.random.randint(k_lbl, (B,), 0, num_classes, dtype=jnp.int32))

    # ---- pure-JAX reference of the torch forward ----------------------------
    en_ref = embeddings / jnp.maximum(
        jnp.linalg.norm(embeddings, axis=1, keepdims=True), EPS)
    dist_ref = jnp.sum((en_ref[:, None, :] - en_ref[None, :, :]) ** 2, axis=-1)

    # ---- tight check: f32 MXU inputs ----------------------------------------
    dist_f32 = pairwise_sq_dists(embeddings, compute_dtype=jnp.float32)
    dist_f32 = jax.block_until_ready(dist_f32)
    assert np.allclose(np.asarray(dist_f32[:B, :B]), np.asarray(dist_ref),
                       atol=1e-5), "f32 distance matrix mismatch"

    loss_f32 = online_triplet_loss(embeddings, labels, margin=MARGIN,
                                   is_distance=True, compute_dtype=jnp.float32)
    loss_f32 = jax.block_until_ready(loss_f32)

    tri = select_triplets(np.asarray(dist_f32[:B, :B]), labels, MARGIN)
    ap = jnp.sum((en_ref[tri[:, 0]] - en_ref[tri[:, 1]]) ** 2, axis=1)
    an = jnp.sum((en_ref[tri[:, 0]] - en_ref[tri[:, 2]]) ** 2, axis=1)
    ref = jnp.mean(jnp.maximum(ap - an + MARGIN, 0.0))
    assert np.allclose(np.asarray(loss_f32), np.asarray(ref), atol=1e-5), \
        (loss_f32, ref)

    # ---- default path: bf16 MXU inputs, f32 accumulation --------------------
    dist_bf16 = jax.block_until_ready(pairwise_sq_dists(embeddings))
    assert np.allclose(np.asarray(dist_bf16[:B, :B]), np.asarray(dist_ref),
                       atol=5e-2), "bf16 distance matrix out of tolerance"
    loss_bf16 = jax.block_until_ready(
        online_triplet_loss(embeddings, labels, margin=MARGIN, is_distance=True))
    assert np.isfinite(float(loss_bf16)) and float(loss_bf16) >= 0.0

    print("KERNEL_OK")
</pallas_src>

<mosaic_0001>
module attributes {stable_mosaic.version = 11 : i64} {
  func.func @_fused_norm_gram_kernel(%arg0: i32, %arg1: memref<16x128xf32, #tpu.memory_space<vmem>>, %arg2: memref<128x128xf32, #tpu.memory_space<vmem>>, %arg3: memref<16x128xf32, #tpu.memory_space<vmem>>) attributes {dimension_semantics = [#tpu.dimension_semantics<parallel>], iteration_bounds = array<i64: 1>, scalar_prefetch = 0 : i64, scratch_operands = 0 : i64, tpu.core_type = #tpu.core_type<tc>, window_params = [{transform_indices = @transform_0, window_bounds = array<i64: 16, 128>}, {pipeline_mode = #tpu.pipeline_mode<synchronous>, transform_indices = @transform_1, window_bounds = array<i64: 128, 128>}, {transform_indices = @transform_2, window_bounds = array<i64: 16, 128>}]} {
    %c0 = arith.constant 0 : index
    %c0_0 = arith.constant 0 : index
    %0 = vector.load %arg1[%c0, %c0_0] : memref<16x128xf32, #tpu.memory_space<vmem>>, vector<16x128xf32>
    %1 = arith.mulf %0, %0 : vector<16x128xf32>
    %cst = arith.constant dense<0.000000e+00> : vector<16xf32>
    %2 = vector.multi_reduction <add>, %1, %cst [1] : vector<16x128xf32> to vector<16xf32>
    %3 = vector.shape_cast %2 : vector<16xf32> to vector<16x1xf32>
    %cst_1 = arith.constant 1.000000e-24 : f32
    %4 = vector.broadcast %cst_1 : f32 to vector<16x1xf32>
    %5 = arith.maximumf %3, %4 : vector<16x1xf32>
    %6 = math.rsqrt %5 : vector<16x1xf32>
    %7 = vector.broadcast %6 : vector<16x1xf32> to vector<16x128xf32>
    %8 = arith.mulf %0, %7 : vector<16x128xf32>
    %c0_2 = arith.constant 0 : index
    %c0_3 = arith.constant 0 : index
    %9 = vector.load %arg2[%c0_2, %c0_3] : memref<128x128xf32, #tpu.memory_space<vmem>>, vector<128x128xf32>
    %10 = arith.mulf %9, %9 : vector<128x128xf32>
    %cst_4 = arith.constant dense<0.000000e+00> : vector<128xf32>
    %11 = vector.multi_reduction <add>, %10, %cst_4 [1] : vector<128x128xf32> to vector<128xf32>
    %12 = vector.shape_cast %11 : vector<128xf32> to vector<128x1xf32>
    %cst_5 = arith.constant 1.000000e-24 : f32
    %13 = vector.broadcast %cst_5 : f32 to vector<128x1xf32>
    %14 = arith.maximumf %12, %13 : vector<128x1xf32>
    %15 = math.rsqrt %14 : vector<128x1xf32>
    %16 = vector.broadcast %15 : vector<128x1xf32> to vector<128x128xf32>
    %17 = arith.mulf %9, %16 : vector<128x128xf32>
    %cst_6 = arith.constant dense<0.000000e+00> : vector<16x128xf32>
    %18 = tpu.matmul %8, %17, %cst_6 {dimension_numbers = #tpu.dot_dimension_numbers<[1], [1], [0], [0], [0, 0, 1, 0], [], []>} : vector<16x128xf32>, vector<128x128xf32>, vector<16x128xf32> -> vector<16x128xf32>
    %cst_7 = arith.constant 2.000000e+00 : f32
    %19 = vector.broadcast %cst_7 : f32 to vector<16x128xf32>
    %20 = arith.mulf %19, %18 : vector<16x128xf32>
    %cst_8 = arith.constant 2.000000e+00 : f32
    %21 = vector.broadcast %cst_8 : f32 to vector<16x128xf32>
    %22 = arith.subf %21, %20 : vector<16x128xf32>
    %cst_9 = arith.constant 0.000000e+00 : f32
    %23 = vector.broadcast %cst_9 : f32 to vector<16x128xf32>
    %24 = arith.maximumf %22, %23 : vector<16x128xf32>
    %c0_10 = arith.constant 0 : index
    %c0_11 = arith.constant 0 : index
    %25 = vector.load %arg3[%c0_10, %c0_11] : memref<16x128xf32, #tpu.memory_space<vmem>>, vector<16x128xf32>
    tpu.vector_store %arg3[%c0_10, %c0_11], %24 {strides = array<i32>} : memref<16x128xf32, #tpu.memory_space<vmem>>, vector<16x128xf32>,
    return
  }
  func.func @transform_0(%arg0: i32) -> (i32, i32) {
    %c0_i32 = arith.constant 0 : i32
    %c0_i32_0 = arith.constant 0 : i32
    return %arg0, %c0_i32 : i32, i32
  }
  func.func @transform_1(%arg0: i32) -> (i32, i32) {
    %c0_i32 = arith.constant 0 : i32
    %c0_i32_0 = arith.constant 0 : i32
    %c0_i32_1 = arith.constant 0 : i32
    return %c0_i32, %c0_i32_0 : i32, i32
  }
  func.func @transform_2(%arg0: i32) -> (i32, i32) {
    %c0_i32 = arith.constant 0 : i32
    %c0_i32_0 = arith.constant 0 : i32
    return %arg0, %c0_i32 : i32, i32
  }
}

</mosaic_0001>

<llo_original>
// kernel: tpu_custom_call.1
$region0: #{tpu_custom_call.1}
  #allocation0 [shape = 'u32[]', space=smem, size = 0x4, offset = 0x4, fixed_abs, tag = 'smem constant byte address 0x4 - core index']
  #allocation1 [shape = 'u32[144,128]{1,0:T(1,128)}', space=vmem, size = 0x12000, scoped, tag = 'internal scratch']
  %s0 = inlined_call_operand.hbm [shape: f32[16,128], index: 0, kind: input, shape index: {}]
  %s1 = inlined_call_operand.hbm [shape: f32[128,128], index: 1, kind: input, shape index: {}]
  %s2 = inlined_call_operand.hbm [shape: f32[16,128], index: 2, kind: output, shape index: {}]
  %s3 = sld [smem:[#allocation0]]
  $region26: #{tpu_custom_call.1} parent=0
    _
  %s5 = ssub.s32 1, %s3
  %s6 = scalar_select 0, %s5, %s3
  $region1: #{tpu_custom_call.1} parent=0
    #allocation2 [shape = 'u8[8192]{0}', space=vmem, size = 0x2000, scoped, tag = 'input window, operand 0, single buffered']
    #allocation3 [shape = 's32[1]{0}', space=sflag, size = 0x4, scoped, tag = 'scoped memory for tpu_custom_call.1']
    #allocation4 [shape = 's32[1]{0}', space=sflag, size = 0x4, scoped, tag = 'scoped memory for tpu_custom_call.1']
    #allocation5 [shape = 'u8[65536]{0}', space=vmem, size = 0x10000, scoped, tag = 'input window, operand 1, single buffered']
    #allocation6 [shape = 's32[1]{0}', space=sflag, size = 0x4, scoped, tag = 'scoped memory for tpu_custom_call.1']
    #allocation7 [shape = 'u8[8192]{0}', space=vmem, size = 0x2000, scoped, tag = 'output window, operand 0, single buffered']
    %7 = vsyncpa [#allocation3], 0
    %8 = vsyncpa [#allocation6], 0
    %9 = vsyncpa [#allocation4], 0
    // Predicated region
    $region2: #{tpu_custom_call.1} parent=1 // pred_check
      _
    $region3: #{tpu_custom_call.1} parent=1 // pred_check_branch
      %11 = sbr.rel (0) target = $region5
    $region4: #{tpu_custom_call.1} parent=1 // pred_region
      %s13 = ssub.s32 256, 256
      %14 = vsyncadd [#allocation3], %s13
      %s15 = sshll.u32 [#allocation2], 4
      %s16 = int_to_ptr.vmem [resolvable:$true] %s15
      %21 = dma.hbm_to_vmem [thread:$0]  %s0, 256, %s16, [#allocation3], 128, 128, 8
    $region5: #{tpu_custom_call.1} parent=1 // pred_fallthru
      _
    // Predicated region
    $region6: #{tpu_custom_call.1} parent=1 // pred_check
      _
    $region7: #{tpu_custom_call.1} parent=1 // pred_check_branch
      %23 = sbr.rel (0) target = $region9
    $region8: #{tpu_custom_call.1} parent=1 // pred_region
      %s25 = ssub.s32 2048, 2048
      %26 = vsyncadd [#allocation6], %s25
      %s27 = sshll.u32 [#allocation5], 4
      %s28 = int_to_ptr.vmem [resolvable:$true] %s27
      %33 = dma.hbm_to_vmem [thread:$0]  %s1, 2048, %s28, [#allocation6], 128, 128, 8
    $region9: #{tpu_custom_call.1} parent=1 // pred_fallthru
      _
    // Predicated region
    $region10: #{tpu_custom_call.1} parent=1 // pred_check
      _
    $region11: #{tpu_custom_call.1} parent=1 // pred_check_branch
      %35 = sbr.rel (0) target = $region13
    $region12: #{tpu_custom_call.1} parent=1 // pred_region
      %36 = dma.done [#allocation3], 256
    $region13: #{tpu_custom_call.1} parent=1 // pred_fallthru
      _
    // Predicated region
    $region14: #{tpu_custom_call.1} parent=1 // pred_check
      _
    $region15: #{tpu_custom_call.1} parent=1 // pred_check_branch
      %38 = sbr.rel (0) target = $region17
    $region16: #{tpu_custom_call.1} parent=1 // pred_region
      %39 = dma.done [#allocation6], 2048
    $region17: #{tpu_custom_call.1} parent=1 // pred_fallthru
      _
    %v40 = vld [vmem:[#allocation2] sm:$0xff]
    %v41 = vld [vmem:[#allocation2 + $0x8] sm:$0xff]
    %v42 = vmul.f32 %v40, %v40
    %v43 = vmul.f32 %v41, %v41
    %44 = vadd.xlane.f32.xlu0 %v42
    %v45 = vpop.xlane.xlu0 %44
    %46 = vadd.xlane.f32.xlu0 %v43
    %v47 = vpop.xlane.xlu0 %46
    %v48 = vmax.f32 %v45, 1e-24
    %v49 = vmax.f32 %v47, 1e-24
    %v50 = vrsqrt.pop %v48
    %v51 = vrsqrt.pop %v49
    %v52 = vmul.f32 %v40, %v50
    %v53 = vmul.f32 %v41, %v51
    %v54 = vld [vmem:[#allocation5] sm:$0xff]
    %v55 = vld [vmem:[#allocation5 + $0x8] sm:$0xff]
    %v56 = vld [vmem:[#allocation5 + $0x10] sm:$0xff]
    %v57 = vld [vmem:[#allocation5 + $0x18] sm:$0xff]
    %v58 = vld [vmem:[#allocation5 + $0x20] sm:$0xff]
    %v59 = vld [vmem:[#allocation5 + $0x28] sm:$0xff]
    %v60 = vld [vmem:[#allocation5 + $0x30] sm:$0xff]
    %v61 = vld [vmem:[#allocation5 + $0x38] sm:$0xff]
    %v62 = vld [vmem:[#allocation5 + $0x40] sm:$0xff]
    %v63 = vld [vmem:[#allocation5 + $0x48] sm:$0xff]
    %v64 = vld [vmem:[#allocation5 + $0x50] sm:$0xff]
    %v65 = vld [vmem:[#allocation5 + $0x58] sm:$0xff]
    %v66 = vld [vmem:[#allocation5 + $0x60] sm:$0xff]
    %v67 = vld [vmem:[#allocation5 + $0x68] sm:$0xff]
    %v68 = vld [vmem:[#allocation5 + $0x70] sm:$0xff]
    %v69 = vld [vmem:[#allocation5 + $0x78] sm:$0xff]
    %v70 = vmul.f32 %v54, %v54
    %v71 = vmul.f32 %v55, %v55
    %v72 = vmul.f32 %v56, %v56
    %v73 = vmul.f32 %v57, %v57
    %v74 = vmul.f32 %v58, %v58
    %v75 = vmul.f32 %v59, %v59
    %v76 = vmul.f32 %v60, %v60
    %v77 = vmul.f32 %v61, %v61
    %v78 = vmul.f32 %v62, %v62
    %v79 = vmul.f32 %v63, %v63
    %v80 = vmul.f32 %v64, %v64
    %v81 = vmul.f32 %v65, %v65
    %v82 = vmul.f32 %v66, %v66
    %v83 = vmul.f32 %v67, %v67
    %v84 = vmul.f32 %v68, %v68
    %v85 = vmul.f32 %v69, %v69
    %86 = vadd.xlane.f32.xlu0 %v70
    %v87 = vpop.xlane.xlu0 %86
    %88 = vadd.xlane.f32.xlu0 %v71
    %v89 = vpop.xlane.xlu0 %88
    %90 = vadd.xlane.f32.xlu0 %v72
    %v91 = vpop.xlane.xlu0 %90
    %92 = vadd.xlane.f32.xlu0 %v73
    %v93 = vpop.xlane.xlu0 %92
    %94 = vadd.xlane.f32.xlu0 %v74
    %v95 = vpop.xlane.xlu0 %94
    %96 = vadd.xlane.f32.xlu0 %v75
    %v97 = vpop.xlane.xlu0 %96
    %98 = vadd.xlane.f32.xlu0 %v76
    %v99 = vpop.xlane.xlu0 %98
    %100 = vadd.xlane.f32.xlu0 %v77
    %v101 = vpop.xlane.xlu0 %100
    %102 = vadd.xlane.f32.xlu0 %v78
    %v103 = vpop.xlane.xlu0 %102
    %104 = vadd.xlane.f32.xlu0 %v79
    %v105 = vpop.xlane.xlu0 %104
    %106 = vadd.xlane.f32.xlu0 %v80
    %v107 = vpop.xlane.xlu0 %106
    %108 = vadd.xlane.f32.xlu0 %v81
    %v109 = vpop.xlane.xlu0 %108
    %110 = vadd.xlane.f32.xlu0 %v82
    %v111 = vpop.xlane.xlu0 %110
    %112 = vadd.xlane.f32.xlu0 %v83
    %v113 = vpop.xlane.xlu0 %112
    %114 = vadd.xlane.f32.xlu0 %v84
    %v115 = vpop.xlane.xlu0 %114
    %116 = vadd.xlane.f32.xlu0 %v85
    %v117 = vpop.xlane.xlu0 %116
    %v118 = vmax.f32 %v87, 1e-24
    %v119 = vmax.f32 %v89, 1e-24
    %v120 = vmax.f32 %v91, 1e-24
    %v121 = vmax.f32 %v93, 1e-24
    %v122 = vmax.f32 %v95, 1e-24
    %v123 = vmax.f32 %v97, 1e-24
    %v124 = vmax.f32 %v99, 1e-24
    %v125 = vmax.f32 %v101, 1e-24
    %v126 = vmax.f32 %v103, 1e-24
    %v127 = vmax.f32 %v105, 1e-24
    %v128 = vmax.f32 %v107, 1e-24
    %v129 = vmax.f32 %v109, 1e-24
    %v130 = vmax.f32 %v111, 1e-24
    %v131 = vmax.f32 %v113, 1e-24
    %v132 = vmax.f32 %v115, 1e-24
    %v133 = vmax.f32 %v117, 1e-24
    %v134 = vrsqrt.pop %v118
    %v135 = vrsqrt.pop %v119
    %v136 = vrsqrt.pop %v120
    %v137 = vrsqrt.pop %v121
    %v138 = vrsqrt.pop %v122
    %v139 = vrsqrt.pop %v123
    %v140 = vrsqrt.pop %v124
    %v141 = vrsqrt.pop %v125
    %v142 = vrsqrt.pop %v126
    %v143 = vrsqrt.pop %v127
    %v144 = vrsqrt.pop %v128
    %v145 = vrsqrt.pop %v129
    %v146 = vrsqrt.pop %v130
    %v147 = vrsqrt.pop %v131
    %v148 = vrsqrt.pop %v132
    %v149 = vrsqrt.pop %v133
    %v150 = vmul.f32 %v54, %v134
    %v151 = vmul.f32 %v55, %v135
    %v152 = vmul.f32 %v56, %v136
    %v153 = vmul.f32 %v57, %v137
    %v154 = vmul.f32 %v58, %v138
    %v155 = vmul.f32 %v59, %v139
    %v156 = vmul.f32 %v60, %v140
    %v157 = vmul.f32 %v61, %v141
    %v158 = vmul.f32 %v62, %v142
    %v159 = vmul.f32 %v63, %v143
    %v160 = vmul.f32 %v64, %v144
    %v161 = vmul.f32 %v65, %v145
    %v162 = vmul.f32 %v66, %v146
    %v163 = vmul.f32 %v67, %v147
    %v164 = vmul.f32 %v68, %v148
    %v165 = vmul.f32 %v69, %v149
    %166 = vmatprep.subr.mxu0 0.0
    %167 = vmatpush1.xpose.msra.mxu0 %v165
    %168 = vmatprep.subr.mxu0 0.0
    %169 = vmatpush1.xpose.msra.mxu0 %v164
    %170 = vmatprep.subr.mxu0 0.0
    %171 = vmatpush1.xpose.msra.mxu0 %v163
    %172 = vmatprep.subr.mxu0 0.0
    %173 = vmatpush1.xpose.msra.mxu0 %v162
    %174 = vmatprep.subr.mxu0 0.0
    %175 = vmatpush1.xpose.msra.mxu0 %v161
    %176 = vmatprep.subr.mxu0 0.0
    %177 = vmatpush1.xpose.msra.mxu0 %v160
    %178 = vmatprep.subr.mxu0 0.0
    %179 = vmatpush1.xpose.msra.mxu0 %v159
    %180 = vmatprep.subr.mxu0 0.0
    %181 = vmatpush1.xpose.msra.mxu0 %v158
    %182 = vmatprep.subr.mxu0 0.0
    %183 = vmatpush1.xpose.msra.mxu0 %v157
    %184 = vmatprep.subr.mxu0 0.0
    %185 = vmatpush1.xpose.msra.mxu0 %v156
    %186 = vmatprep.subr.mxu0 0.0
    %187 = vmatpush1.xpose.msra.mxu0 %v155
    %188 = vmatprep.subr.mxu0 0.0
    %189 = vmatpush1.xpose.msra.mxu0 %v154
    %190 = vmatprep.subr.mxu0 0.0
    %191 = vmatpush1.xpose.msra.mxu0 %v153
    %192 = vmatprep.subr.mxu0 0.0
    %193 = vmatpush1.xpose.msra.mxu0 %v152
    %194 = vmatprep.subr.mxu0 0.0
    %195 = vmatpush1.xpose.msra.mxu0 %v151
    %196 = vmatprep.subr.mxu0 0.0
    %197 = vmatpush1.xpose.msra.mxu0 %v150
    %198 = vmatprep.subr.mxu0 0.0
    %199 = vmatpush2.xpose.msra.mxu0 0.0
    %200 = vmatprep.subr.mxu0 0.0
    %201 = vmatpush2.xpose.msra.mxu0 0.0
    %202 = vmatprep.subr.mxu0 0.0
    %203 = vmatpush2.xpose.msra.mxu0 0.0
    %204 = vmatprep.subr.mxu0 0.0
    %205 = vmatpush2.xpose.msra.mxu0 0.0
    %206 = vmatprep.subr.mxu0 0.0
    %207 = vmatpush2.xpose.msra.mxu0 0.0
    %208 = vmatprep.subr.mxu0 0.0
    %209 = vmatpush2.xpose.msra.mxu0 0.0
    %210 = vmatprep.subr.mxu0 0.0
    %211 = vmatpush2.xpose.msra.mxu0 0.0
    %212 = vmatprep.subr.mxu0 0.0
    %213 = vmatpush2.xpose.msra.mxu0 0.0
    %214 = vmatprep.subr.mxu0 0.0
    %215 = vmatpush2.xpose.msra.mxu0 0.0
    %216 = vmatprep.subr.mxu0 0.0
    %217 = vmatpush2.xpose.msra.mxu0 0.0
    %218 = vmatprep.subr.mxu0 0.0
    %219 = vmatpush2.xpose.msra.mxu0 0.0
    %220 = vmatprep.subr.mxu0 0.0
    %221 = vmatpush2.xpose.msra.mxu0 0.0
    %222 = vmatprep.subr.mxu0 0.0
    %223 = vmatpush2.xpose.msra.mxu0 0.0
    %224 = vmatprep.subr.mxu0 0.0
    %225 = vmatpush2.xpose.msra.mxu0 0.0
    %226 = vmatprep.subr.mxu0 0.0
    %227 = vmatpush2.xpose.msra.mxu0 0.0
    %228 = vmatprep.subr.mxu0 0.0
    %229 = vmatpush2.xpose.msra.mxu0 0.0
    %230 = vmatprep.mubr.f32.mxu0 0.0
    %231 = vmatmul.mubr.f32.gmra.mxu0 %v52
    %v232 = vpop.f32.mrf.mxu0
    %v233 = vadd.f32 0.0, %v232
    %v234 = vpop.f32.mrf.mxu0
    %235 = vmatprep.mubr.f32.mxu0 0.0
    %236 = vmatmul.mubr.f32.gmra.mxu0 %v53
    %v237 = vpop.f32.mrf.mxu0
    %v238 = vadd.f32 0.0, %v237
    %v239 = vpop.f32.mrf.mxu0
    %240 = vdwg.mxu0
    %v241 = vmul.f32 %v233, 2.0
    %v242 = vmul.f32 %v238, 2.0
    %v243 = vsub.f32 2.0, %v241
    %v244 = vsub.f32 2.0, %v242
    %v245 = vmax.f32 %v243, 0.0
    %v246 = vmax.f32 %v244, 0.0
    %247 = vst [vmem:[#allocation7] sm:$0xff] %v245
    %248 = vst [vmem:[#allocation7 + $0x8] sm:$0xff] %v246
    // Predicated region
    $region18: #{tpu_custom_call.1} parent=1 // pred_check
      _
    $region19: #{tpu_custom_call.1} parent=1 // pred_check_branch
      %250 = sbr.rel (0) target = $region21
    $region20: #{tpu_custom_call.1} parent=1 // pred_region
      %s252 = ssub.s32 256, 256
      %253 = vsyncadd [#allocation4], %s252
      %s254 = sshll.u32 [#allocation7], 4
      %s255 = int_to_ptr.vmem [resolvable:$true] %s254
      %260 = dma.vmem_to_hbm [thread:$0]  %s255, 256, %s2, [#allocation4], 128, 128, 8
    $region21: #{tpu_custom_call.1} parent=1 // pred_fallthru
      _
    // Predicated region
    $region22: #{tpu_custom_call.1} parent=1 // pred_check
      _
    $region23: #{tpu_custom_call.1} parent=1 // pred_check_branch
      %262 = sbr.rel (0) target = $region25
    $region24: #{tpu_custom_call.1} parent=1 // pred_region
      %263 = dma.done [#allocation4], 256
    $region25: #{tpu_custom_call.1} parent=1 // pred_fallthru
      _
    %264 = vsyncpa [#allocation3], 1
    %265 = vsyncpa [#allocation6], 1
    %266 = vsyncpa [#allocation4], 1

</llo_original>
